<compile_context>
chip_gen: v5e
topology: v5e:2x2
jax: 0.10.0
libtpu: 0.0.40
codegen_flags: <defaults>
</compile_context>

<pallas_src>
import functools
import math

import jax
import jax.numpy as jnp
from jax.experimental import pallas as pl
from jax.experimental.pallas import tpu as pltpu


def _mha_kernel(x_ref, wqkv_ref, bqkv_ref, wo_ref, bo_ref, o_ref, *,
                batch, seq, num_heads, head_dim):
    """Fused MHA forward for the whole (small) batch in one grid step.

    x_ref   : (B*S, I)      bf16 input (batch folded into M)
    wqkv_ref: (I, 3E)       bf16 qkv weight, columns [Q heads | K heads | V heads],
                            Q columns pre-scaled by 1/sqrt(head_dim)
    bqkv_ref: (1, 3E)       f32 qkv bias (same order/scaling)
    wo_ref  : (E, Epad)     bf16 output-proj weight, zero-padded to lane-dense Epad
    bo_ref  : (1, Epad)     f32 output-proj bias (padded)
    o_ref   : (B*S, Epad)   f32 output (lane-dense stores)
    """
    B, S, H, hd = batch, seq, num_heads, head_dim
    E = H * hd

    # --- QKV projection: one bf16 MXU matmul for all batches/heads/q,k,v ---
    qkv = jnp.dot(x_ref[...], wqkv_ref[...],
                  preferred_element_type=jnp.float32) + bqkv_ref[...]   # (B*S, 3E) f32

    # --- pack into head-batched (B*H, S, hd); static slices only (layout prep) ---
    def to_heads(col0):
        blocks = []
        for b in range(B):
            rows = qkv[b * S:(b + 1) * S]                 # (S, 3E), sublane-aligned
            for h in range(H):
                c = col0 + h * hd
                blocks.append(rows[:, c:c + hd])          # (S, hd)
        return jnp.stack(blocks, axis=0).astype(jnp.bfloat16)   # (B*H, S, hd)

    q = to_heads(0)          # scale already folded into Q weight columns
    k = to_heads(E)
    v = to_heads(2 * E)

    # --- batched attention over the B*H batch dim (single batched MXU GEMMs) ---
    logits = jnp.einsum("bqd,bkd->bqk", q, k,
                        preferred_element_type=jnp.float32)      # (B*H, S, S) f32

    # numerically stable softmax, stats in f32; divide on EUP via approx recip
    m = jnp.max(logits, axis=-1, keepdims=True)
    p = jnp.exp(logits - m)
    l = jnp.sum(p, axis=-1, keepdims=True)
    probs = (p * pl.reciprocal(l, approx=True)).astype(jnp.bfloat16)

    ov = jnp.einsum("bqk,bkd->bqd", probs, v,
                    preferred_element_type=jnp.float32)          # (B*H, S, hd) f32

    # --- reassemble (B*S, E) and fused output projection (lane-dense Epad) ---
    vals = jnp.concatenate(
        [jnp.concatenate([ov[b * H + h] for h in range(H)], axis=-1)
         for b in range(B)],
        axis=0).astype(jnp.bfloat16)                             # (B*S, E) bf16

    o = jnp.dot(vals, wo_ref[...],
                preferred_element_type=jnp.float32) + bo_ref[...]  # (B*S, Epad)
    o_ref[...] = o.astype(o_ref.dtype)


def _prep_qkv_params(w_qkv_t, b_qkv, num_heads, head_dim):
    """Reorder qkv columns from PyTorch's per-head [q|k|v] interleave to
    [Q heads | K heads | V heads], and fold 1/sqrt(head_dim) into Q."""
    in_dim, three_e = w_qkv_t.shape
    embed_dim = three_e // 3
    scale = jnp.asarray([1.0 / math.sqrt(head_dim), 1.0, 1.0], dtype=w_qkv_t.dtype)

    w = w_qkv_t.reshape(in_dim, num_heads, 3, head_dim) * scale[None, None, :, None]
    w = jnp.transpose(w, (0, 2, 1, 3)).reshape(in_dim, 3 * embed_dim)

    b = b_qkv.reshape(num_heads, 3, head_dim) * scale[None, :, None]
    b = jnp.transpose(b, (1, 0, 2)).reshape(1, 3 * embed_dim)
    return w, b


@functools.partial(jax.jit, static_argnames=("num_heads",))
def multihead_attention(x, w_qkv_t, b_qkv, w_o_t, b_o, num_heads):
    """Fused MHA forward.

    x      : (B, S, input_dim)
    w_qkv_t: (input_dim, 3*embed_dim)   (= torch qkv_proj.weight.T)
    b_qkv  : (3*embed_dim,)
    w_o_t  : (embed_dim, embed_dim)     (= torch o_proj.weight.T)
    b_o    : (embed_dim,)
    returns (B, S, embed_dim)  float32
    """
    B, S, I = x.shape
    three_e = w_qkv_t.shape[1]
    E = three_e // 3
    hd = E // num_heads

    LANE = 128
    Epad = ((E + LANE - 1) // LANE) * LANE            # lane-dense output width

    # weight-layout plumbing (done once, outside the kernel)
    w_qkv_r, b_qkv_r = _prep_qkv_params(w_qkv_t, b_qkv, num_heads, hd)
    w_o_p = jnp.zeros((E, Epad), w_o_t.dtype).at[:, :E].set(w_o_t)
    b_o_p = jnp.zeros((1, Epad), b_o.dtype).at[:, :E].set(b_o)

    # bf16 MXU operands; biases stay f32 (added to f32 accumulators)
    x2d = x.reshape(B * S, I).astype(jnp.bfloat16)
    w_qkv_bf = w_qkv_r.astype(jnp.bfloat16)
    w_o_bf = w_o_p.astype(jnp.bfloat16)
    b_qkv_f32 = b_qkv_r.astype(jnp.float32)
    b_o_f32 = b_o_p.astype(jnp.float32)

    kernel = functools.partial(_mha_kernel, batch=B, seq=S,
                               num_heads=num_heads, head_dim=hd)

    out = pl.pallas_call(
        kernel,
        out_shape=jax.ShapeDtypeStruct((B * S, Epad), jnp.float32),
        grid=(1,),                                     # whole workload in one step
        in_specs=[
            pl.BlockSpec((B * S, I), lambda i: (0, 0)),
            pl.BlockSpec((I, 3 * E), lambda i: (0, 0)),
            pl.BlockSpec((1, 3 * E), lambda i: (0, 0)),
            pl.BlockSpec((E, Epad), lambda i: (0, 0)),
            pl.BlockSpec((1, Epad), lambda i: (0, 0)),
        ],
        out_specs=pl.BlockSpec((B * S, Epad), lambda i: (0, 0)),
        compiler_params=pltpu.CompilerParams(
            dimension_semantics=("arbitrary",)),
    )(x2d, w_qkv_bf, b_qkv_f32, w_o_bf, b_o_f32)

    return out[:, :E].reshape(B, S, E)


def mha_reference(x, w_qkv_t, b_qkv, w_o_t, b_o, num_heads):
    """Pure-JAX f32 reference following the PyTorch module exactly."""
    B, S, _ = x.shape
    three_e = w_qkv_t.shape[1]
    E = three_e // 3
    hd = E // num_heads
    qkv = x @ w_qkv_t + b_qkv                                   # (B, S, 3E)
    qkv = qkv.reshape(B, S, num_heads, 3 * hd).transpose(0, 2, 1, 3)
    q, k, v = jnp.split(qkv, 3, axis=-1)                        # (B, H, S, hd)
    logits = jnp.einsum("bhqd,bhkd->bhqk", q, k) / math.sqrt(hd)
    attn = jax.nn.softmax(logits, axis=-1)
    vals = jnp.einsum("bhqk,bhkd->bhqd", attn, v)               # (B, H, S, hd)
    vals = vals.transpose(0, 2, 1, 3).reshape(B, S, E)
    return vals @ w_o_t + b_o


if __name__ == "__main__":
    # small shapes consistent with the module
    B, S = 2, 8
    input_dim, embed_dim, num_heads = 16, 32, 4

    key = jax.random.PRNGKey(0)
    k_wqkv, k_wo, k_x = jax.random.split(key, 3)

    # xavier_uniform_ like the module's _reset_parameters (bias filled with 0)
    bound_qkv = math.sqrt(6.0 / (input_dim + 3 * embed_dim))
    w_qkv_t = jax.random.uniform(k_wqkv, (input_dim, 3 * embed_dim),
                                 jnp.float32, -bound_qkv, bound_qkv)
    b_qkv = jnp.zeros((3 * embed_dim,), jnp.float32)
    bound_o = math.sqrt(6.0 / (embed_dim + embed_dim))
    w_o_t = jax.random.uniform(k_wo, (embed_dim, embed_dim),
                               jnp.float32, -bound_o, bound_o)
    b_o = jnp.zeros((embed_dim,), jnp.float32)

    x = jax.random.normal(k_x, (B, S, input_dim), jnp.float32)

    out = multihead_attention(x, w_qkv_t, b_qkv, w_o_t, b_o, num_heads)
    out = jax.block_until_ready(out)
    assert out.shape == (B, S, embed_dim), out.shape

    ref = mha_reference(x, w_qkv_t, b_qkv, w_o_t, b_o, num_heads)
    # tolerance loosened vs f32-only version: bf16 MXU operands + approx reciprocal
    max_err = float(jnp.max(jnp.abs(out - ref)))
    assert max_err < 5e-2, f"mismatch vs reference: max abs err {max_err}"

    print("KERNEL_OK")
</pallas_src>

<mosaic_0001>
module attributes {stable_mosaic.version = 11 : i64} {
  func.func @_mha_kernel(%arg0: i32, %arg1: memref<16x16xbf16, #tpu.memory_space<vmem>>, %arg2: memref<16x96xbf16, #tpu.memory_space<vmem>>, %arg3: memref<1x96xf32, #tpu.memory_space<vmem>>, %arg4: memref<32x128xbf16, #tpu.memory_space<vmem>>, %arg5: memref<1x128xf32, #tpu.memory_space<vmem>>, %arg6: memref<16x128xf32, #tpu.memory_space<vmem>>) attributes {dimension_semantics = [#tpu.dimension_semantics<arbitrary>], iteration_bounds = array<i64: 1>, scalar_prefetch = 0 : i64, scratch_operands = 0 : i64, tpu.core_type = #tpu.core_type<tc>, window_params = [{pipeline_mode = #tpu.pipeline_mode<synchronous>, transform_indices = @transform_0, window_bounds = array<i64: 16, 16>}, {pipeline_mode = #tpu.pipeline_mode<synchronous>, transform_indices = @transform_1, window_bounds = array<i64: 16, 96>}, {pipeline_mode = #tpu.pipeline_mode<synchronous>, transform_indices = @transform_2, window_bounds = array<i64: 1, 96>}, {pipeline_mode = #tpu.pipeline_mode<synchronous>, transform_indices = @transform_3, window_bounds = array<i64: 32, 128>}, {pipeline_mode = #tpu.pipeline_mode<synchronous>, transform_indices = @transform_4, window_bounds = array<i64: 1, 128>}, {pipeline_mode = #tpu.pipeline_mode<synchronous>, transform_indices = @transform_5, window_bounds = array<i64: 16, 128>}]} {
    %c0 = arith.constant 0 : index
    %c0_0 = arith.constant 0 : index
    %0 = vector.load %arg1[%c0, %c0_0] : memref<16x16xbf16, #tpu.memory_space<vmem>>, vector<16x16xbf16>
    %c0_1 = arith.constant 0 : index
    %c0_2 = arith.constant 0 : index
    %1 = vector.load %arg2[%c0_1, %c0_2] : memref<16x96xbf16, #tpu.memory_space<vmem>>, vector<16x96xbf16>
    %cst = arith.constant dense<0.000000e+00> : vector<16x96xf32>
    %2 = tpu.matmul %0, %1, %cst {dimension_numbers = #tpu.dot_dimension_numbers<[1], [0], [0], [1], [0, 0, 1, 1], [], []>} : vector<16x16xbf16>, vector<16x96xbf16>, vector<16x96xf32> -> vector<16x96xf32>
    %c0_3 = arith.constant 0 : index
    %c0_4 = arith.constant 0 : index
    %3 = vector.load %arg3[%c0_3, %c0_4] : memref<1x96xf32, #tpu.memory_space<vmem>>, vector<1x96xf32>
    %4 = vector.broadcast %3 : vector<1x96xf32> to vector<16x96xf32>
    %5 = arith.addf %2, %4 : vector<16x96xf32>
    %6 = vector.extract_strided_slice %5 {offsets = [0, 0], sizes = [8, 96], strides = [1, 1]} : vector<16x96xf32> to vector<8x96xf32>
    %7 = vector.extract_strided_slice %6 {offsets = [0, 0], sizes = [8, 8], strides = [1, 1]} : vector<8x96xf32> to vector<8x8xf32>
    %8 = vector.extract_strided_slice %6 {offsets = [0, 8], sizes = [8, 8], strides = [1, 1]} : vector<8x96xf32> to vector<8x8xf32>
    %9 = vector.extract_strided_slice %6 {offsets = [0, 16], sizes = [8, 8], strides = [1, 1]} : vector<8x96xf32> to vector<8x8xf32>
    %10 = vector.extract_strided_slice %6 {offsets = [0, 24], sizes = [8, 8], strides = [1, 1]} : vector<8x96xf32> to vector<8x8xf32>
    %11 = vector.extract_strided_slice %5 {offsets = [8, 0], sizes = [8, 96], strides = [1, 1]} : vector<16x96xf32> to vector<8x96xf32>
    %12 = vector.extract_strided_slice %11 {offsets = [0, 0], sizes = [8, 8], strides = [1, 1]} : vector<8x96xf32> to vector<8x8xf32>
    %13 = vector.extract_strided_slice %11 {offsets = [0, 8], sizes = [8, 8], strides = [1, 1]} : vector<8x96xf32> to vector<8x8xf32>
    %14 = vector.extract_strided_slice %11 {offsets = [0, 16], sizes = [8, 8], strides = [1, 1]} : vector<8x96xf32> to vector<8x8xf32>
    %15 = vector.extract_strided_slice %11 {offsets = [0, 24], sizes = [8, 8], strides = [1, 1]} : vector<8x96xf32> to vector<8x8xf32>
    %16 = vector.shape_cast %7 : vector<8x8xf32> to vector<1x8x8xf32>
    %17 = vector.shape_cast %8 : vector<8x8xf32> to vector<1x8x8xf32>
    %18 = vector.shape_cast %9 : vector<8x8xf32> to vector<1x8x8xf32>
    %19 = vector.shape_cast %10 : vector<8x8xf32> to vector<1x8x8xf32>
    %20 = vector.shape_cast %12 : vector<8x8xf32> to vector<1x8x8xf32>
    %21 = vector.shape_cast %13 : vector<8x8xf32> to vector<1x8x8xf32>
    %22 = vector.shape_cast %14 : vector<8x8xf32> to vector<1x8x8xf32>
    %23 = vector.shape_cast %15 : vector<8x8xf32> to vector<1x8x8xf32>
    %24 = tpu.concatenate %16, %17, %18, %19, %20, %21, %22, %23 in 0 : vector<1x8x8xf32>, vector<1x8x8xf32>, vector<1x8x8xf32>, vector<1x8x8xf32>, vector<1x8x8xf32>, vector<1x8x8xf32>, vector<1x8x8xf32>, vector<1x8x8xf32> -> vector<8x8x8xf32>
    %25 = arith.truncf %24 : vector<8x8x8xf32> to vector<8x8x8xbf16>
    %26 = vector.extract_strided_slice %5 {offsets = [0, 0], sizes = [8, 96], strides = [1, 1]} : vector<16x96xf32> to vector<8x96xf32>
    %27 = vector.extract_strided_slice %26 {offsets = [0, 32], sizes = [8, 8], strides = [1, 1]} : vector<8x96xf32> to vector<8x8xf32>
    %28 = vector.extract_strided_slice %26 {offsets = [0, 40], sizes = [8, 8], strides = [1, 1]} : vector<8x96xf32> to vector<8x8xf32>
    %29 = vector.extract_strided_slice %26 {offsets = [0, 48], sizes = [8, 8], strides = [1, 1]} : vector<8x96xf32> to vector<8x8xf32>
    %30 = vector.extract_strided_slice %26 {offsets = [0, 56], sizes = [8, 8], strides = [1, 1]} : vector<8x96xf32> to vector<8x8xf32>
    %31 = vector.extract_strided_slice %5 {offsets = [8, 0], sizes = [8, 96], strides = [1, 1]} : vector<16x96xf32> to vector<8x96xf32>
    %32 = vector.extract_strided_slice %31 {offsets = [0, 32], sizes = [8, 8], strides = [1, 1]} : vector<8x96xf32> to vector<8x8xf32>
    %33 = vector.extract_strided_slice %31 {offsets = [0, 40], sizes = [8, 8], strides = [1, 1]} : vector<8x96xf32> to vector<8x8xf32>
    %34 = vector.extract_strided_slice %31 {offsets = [0, 48], sizes = [8, 8], strides = [1, 1]} : vector<8x96xf32> to vector<8x8xf32>
    %35 = vector.extract_strided_slice %31 {offsets = [0, 56], sizes = [8, 8], strides = [1, 1]} : vector<8x96xf32> to vector<8x8xf32>
    %36 = vector.shape_cast %27 : vector<8x8xf32> to vector<1x8x8xf32>
    %37 = vector.shape_cast %28 : vector<8x8xf32> to vector<1x8x8xf32>
    %38 = vector.shape_cast %29 : vector<8x8xf32> to vector<1x8x8xf32>
    %39 = vector.shape_cast %30 : vector<8x8xf32> to vector<1x8x8xf32>
    %40 = vector.shape_cast %32 : vector<8x8xf32> to vector<1x8x8xf32>
    %41 = vector.shape_cast %33 : vector<8x8xf32> to vector<1x8x8xf32>
    %42 = vector.shape_cast %34 : vector<8x8xf32> to vector<1x8x8xf32>
    %43 = vector.shape_cast %35 : vector<8x8xf32> to vector<1x8x8xf32>
    %44 = tpu.concatenate %36, %37, %38, %39, %40, %41, %42, %43 in 0 : vector<1x8x8xf32>, vector<1x8x8xf32>, vector<1x8x8xf32>, vector<1x8x8xf32>, vector<1x8x8xf32>, vector<1x8x8xf32>, vector<1x8x8xf32>, vector<1x8x8xf32> -> vector<8x8x8xf32>
    %45 = arith.truncf %44 : vector<8x8x8xf32> to vector<8x8x8xbf16>
    %46 = vector.extract_strided_slice %5 {offsets = [0, 0], sizes = [8, 96], strides = [1, 1]} : vector<16x96xf32> to vector<8x96xf32>
    %47 = vector.extract_strided_slice %46 {offsets = [0, 64], sizes = [8, 8], strides = [1, 1]} : vector<8x96xf32> to vector<8x8xf32>
    %48 = vector.extract_strided_slice %46 {offsets = [0, 72], sizes = [8, 8], strides = [1, 1]} : vector<8x96xf32> to vector<8x8xf32>
    %49 = vector.extract_strided_slice %46 {offsets = [0, 80], sizes = [8, 8], strides = [1, 1]} : vector<8x96xf32> to vector<8x8xf32>
    %50 = vector.extract_strided_slice %46 {offsets = [0, 88], sizes = [8, 8], strides = [1, 1]} : vector<8x96xf32> to vector<8x8xf32>
    %51 = vector.extract_strided_slice %5 {offsets = [8, 0], sizes = [8, 96], strides = [1, 1]} : vector<16x96xf32> to vector<8x96xf32>
    %52 = vector.extract_strided_slice %51 {offsets = [0, 64], sizes = [8, 8], strides = [1, 1]} : vector<8x96xf32> to vector<8x8xf32>
    %53 = vector.extract_strided_slice %51 {offsets = [0, 72], sizes = [8, 8], strides = [1, 1]} : vector<8x96xf32> to vector<8x8xf32>
    %54 = vector.extract_strided_slice %51 {offsets = [0, 80], sizes = [8, 8], strides = [1, 1]} : vector<8x96xf32> to vector<8x8xf32>
    %55 = vector.extract_strided_slice %51 {offsets = [0, 88], sizes = [8, 8], strides = [1, 1]} : vector<8x96xf32> to vector<8x8xf32>
    %56 = vector.shape_cast %47 : vector<8x8xf32> to vector<1x8x8xf32>
    %57 = vector.shape_cast %48 : vector<8x8xf32> to vector<1x8x8xf32>
    %58 = vector.shape_cast %49 : vector<8x8xf32> to vector<1x8x8xf32>
    %59 = vector.shape_cast %50 : vector<8x8xf32> to vector<1x8x8xf32>
    %60 = vector.shape_cast %52 : vector<8x8xf32> to vector<1x8x8xf32>
    %61 = vector.shape_cast %53 : vector<8x8xf32> to vector<1x8x8xf32>
    %62 = vector.shape_cast %54 : vector<8x8xf32> to vector<1x8x8xf32>
    %63 = vector.shape_cast %55 : vector<8x8xf32> to vector<1x8x8xf32>
    %64 = tpu.concatenate %56, %57, %58, %59, %60, %61, %62, %63 in 0 : vector<1x8x8xf32>, vector<1x8x8xf32>, vector<1x8x8xf32>, vector<1x8x8xf32>, vector<1x8x8xf32>, vector<1x8x8xf32>, vector<1x8x8xf32>, vector<1x8x8xf32> -> vector<8x8x8xf32>
    %65 = arith.truncf %64 : vector<8x8x8xf32> to vector<8x8x8xbf16>
    "tpu.trace_start"() <{level = 10 : i32, message = "bqd,bkd->bqk"}> : () -> ()
    %cst_5 = arith.constant dense<0.000000e+00> : vector<8x8x8xf32>
    %66 = tpu.matmul %25, %45, %cst_5 {dimension_numbers = #tpu.dot_dimension_numbers<[2], [2], [1], [1], [0, 0, 0, 1, 1, 1], [0], [0]>} : vector<8x8x8xbf16>, vector<8x8x8xbf16>, vector<8x8x8xf32> -> vector<8x8x8xf32>
    "tpu.trace_stop"() : () -> ()
    %cst_6 = arith.constant dense<0xFF800000> : vector<8x8xf32>
    %67 = vector.multi_reduction <maximumf>, %66, %cst_6 [2] : vector<8x8x8xf32> to vector<8x8xf32>
    %68 = vector.shape_cast %67 : vector<8x8xf32> to vector<8x8x1xf32>
    %69 = vector.broadcast %68 : vector<8x8x1xf32> to vector<8x8x8xf32>
    %70 = arith.subf %66, %69 : vector<8x8x8xf32>
    %71 = math.exp %70 : vector<8x8x8xf32>
    %cst_7 = arith.constant dense<0.000000e+00> : vector<8x8xf32>
    %72 = vector.multi_reduction <add>, %71, %cst_7 [2] : vector<8x8x8xf32> to vector<8x8xf32>
    %73 = vector.shape_cast %72 : vector<8x8xf32> to vector<8x8x1xf32>
    %74 = tpu.reciprocal %73 {approx = true} : vector<8x8x1xf32> -> vector<8x8x1xf32>
    %75 = vector.broadcast %74 : vector<8x8x1xf32> to vector<8x8x8xf32>
    %76 = arith.mulf %71, %75 : vector<8x8x8xf32>
    %77 = arith.truncf %76 : vector<8x8x8xf32> to vector<8x8x8xbf16>
    "tpu.trace_start"() <{level = 10 : i32, message = "bqk,bkd->bqd"}> : () -> ()
    %cst_8 = arith.constant dense<0.000000e+00> : vector<8x8x8xf32>
    %78 = tpu.matmul %77, %65, %cst_8 {dimension_numbers = #tpu.dot_dimension_numbers<[2], [1], [1], [2], [0, 0, 0, 1, 1, 2], [0], [0]>} : vector<8x8x8xbf16>, vector<8x8x8xbf16>, vector<8x8x8xf32> -> vector<8x8x8xf32>
    "tpu.trace_stop"() : () -> ()
    %79 = vector.extract_strided_slice %78 {offsets = [0, 0, 0], sizes = [1, 8, 8], strides = [1, 1, 1]} : vector<8x8x8xf32> to vector<1x8x8xf32>
    %80 = vector.shape_cast %79 : vector<1x8x8xf32> to vector<8x8xf32>
    %81 = vector.extract_strided_slice %78 {offsets = [1, 0, 0], sizes = [1, 8, 8], strides = [1, 1, 1]} : vector<8x8x8xf32> to vector<1x8x8xf32>
    %82 = vector.shape_cast %81 : vector<1x8x8xf32> to vector<8x8xf32>
    %83 = vector.extract_strided_slice %78 {offsets = [2, 0, 0], sizes = [1, 8, 8], strides = [1, 1, 1]} : vector<8x8x8xf32> to vector<1x8x8xf32>
    %84 = vector.shape_cast %83 : vector<1x8x8xf32> to vector<8x8xf32>
    %85 = vector.extract_strided_slice %78 {offsets = [3, 0, 0], sizes = [1, 8, 8], strides = [1, 1, 1]} : vector<8x8x8xf32> to vector<1x8x8xf32>
    %86 = vector.shape_cast %85 : vector<1x8x8xf32> to vector<8x8xf32>
    %87 = tpu.concatenate %80, %82, %84, %86 in 1 : vector<8x8xf32>, vector<8x8xf32>, vector<8x8xf32>, vector<8x8xf32> -> vector<8x32xf32>
    %88 = vector.extract_strided_slice %78 {offsets = [4, 0, 0], sizes = [1, 8, 8], strides = [1, 1, 1]} : vector<8x8x8xf32> to vector<1x8x8xf32>
    %89 = vector.shape_cast %88 : vector<1x8x8xf32> to vector<8x8xf32>
    %90 = vector.extract_strided_slice %78 {offsets = [5, 0, 0], sizes = [1, 8, 8], strides = [1, 1, 1]} : vector<8x8x8xf32> to vector<1x8x8xf32>
    %91 = vector.shape_cast %90 : vector<1x8x8xf32> to vector<8x8xf32>
    %92 = vector.extract_strided_slice %78 {offsets = [6, 0, 0], sizes = [1, 8, 8], strides = [1, 1, 1]} : vector<8x8x8xf32> to vector<1x8x8xf32>
    %93 = vector.shape_cast %92 : vector<1x8x8xf32> to vector<8x8xf32>
    %94 = vector.extract_strided_slice %78 {offsets = [7, 0, 0], sizes = [1, 8, 8], strides = [1, 1, 1]} : vector<8x8x8xf32> to vector<1x8x8xf32>
    %95 = vector.shape_cast %94 : vector<1x8x8xf32> to vector<8x8xf32>
    %96 = tpu.concatenate %89, %91, %93, %95 in 1 : vector<8x8xf32>, vector<8x8xf32>, vector<8x8xf32>, vector<8x8xf32> -> vector<8x32xf32>
    %97 = tpu.concatenate %87, %96 in 0 : vector<8x32xf32>, vector<8x32xf32> -> vector<16x32xf32>
    %98 = arith.truncf %97 : vector<16x32xf32> to vector<16x32xbf16>
    %c0_9 = arith.constant 0 : index
    %c0_10 = arith.constant 0 : index
    %99 = vector.load %arg4[%c0_9, %c0_10] : memref<32x128xbf16, #tpu.memory_space<vmem>>, vector<32x128xbf16>
    %cst_11 = arith.constant dense<0.000000e+00> : vector<16x128xf32>
    %100 = tpu.matmul %98, %99, %cst_11 {dimension_numbers = #tpu.dot_dimension_numbers<[1], [0], [0], [1], [0, 0, 1, 1], [], []>} : vector<16x32xbf16>, vector<32x128xbf16>, vector<16x128xf32> -> vector<16x128xf32>
    %c0_12 = arith.constant 0 : index
    %c0_13 = arith.constant 0 : index
    %101 = vector.load %arg5[%c0_12, %c0_13] : memref<1x128xf32, #tpu.memory_space<vmem>>, vector<1x128xf32>
    %102 = vector.broadcast %101 : vector<1x128xf32> to vector<16x128xf32>
    %103 = arith.addf %100, %102 : vector<16x128xf32>
    %c0_14 = arith.constant 0 : index
    %c0_15 = arith.constant 0 : index
    %104 = vector.load %arg6[%c0_14, %c0_15] : memref<16x128xf32, #tpu.memory_space<vmem>>, vector<16x128xf32>
    tpu.vector_store %arg6[%c0_14, %c0_15], %103 {strides = array<i32>} : memref<16x128xf32, #tpu.memory_space<vmem>>, vector<16x128xf32>,
    return
  }
  func.func @transform_0(%arg0: i32) -> (i32, i32) {
    %c0_i32 = arith.constant 0 : i32
    %c0_i32_0 = arith.constant 0 : i32
    %c0_i32_1 = arith.constant 0 : i32
    return %c0_i32, %c0_i32_0 : i32, i32
  }
  func.func @transform_1(%arg0: i32) -> (i32, i32) {
    %c0_i32 = arith.constant 0 : i32
    %c0_i32_0 = arith.constant 0 : i32
    %c0_i32_1 = arith.constant 0 : i32
    return %c0_i32, %c0_i32_0 : i32, i32
  }
  func.func @transform_2(%arg0: i32) -> (i32, i32) {
    %c0_i32 = arith.constant 0 : i32
    %c0_i32_0 = arith.constant 0 : i32
    %c0_i32_1 = arith.constant 0 : i32
    return %c0_i32, %c0_i32_0 : i32, i32
  }
  func.func @transform_3(%arg0: i32) -> (i32, i32) {
    %c0_i32 = arith.constant 0 : i32
    %c0_i32_0 = arith.constant 0 : i32
    %c0_i32_1 = arith.constant 0 : i32
    return %c0_i32, %c0_i32_0 : i32, i32
  }
  func.func @transform_4(%arg0: i32) -> (i32, i32) {
    %c0_i32 = arith.constant 0 : i32
    %c0_i32_0 = arith.constant 0 : i32
    %c0_i32_1 = arith.constant 0 : i32
    return %c0_i32, %c0_i32_0 : i32, i32
  }
  func.func @transform_5(%arg0: i32) -> (i32, i32) {
    %c0_i32 = arith.constant 0 : i32
    %c0_i32_0 = arith.constant 0 : i32
    %c0_i32_1 = arith.constant 0 : i32
    return %c0_i32, %c0_i32_0 : i32, i32
  }
}

</mosaic_0001>

<llo_original>
// kernel: multihead_attention.1
$region0: #{multihead_attention.1}
  #allocation0 [shape = 'u32[]', space=smem, size = 0x4, offset = 0x4, fixed_abs, tag = 'smem constant byte address 0x4 - core index']
  #allocation1 [shape = 'u32[72,128]{1,0:T(1,128)}', space=vmem, size = 0x9000, scoped, tag = 'internal scratch']
  %s0 = inlined_call_operand.vmem [shape: bf16[16,16], index: 0, kind: input, shape index: {}]
  %s1 = inlined_call_operand.vmem [shape: bf16[16,96], index: 1, kind: input, shape index: {}]
  %s2 = inlined_call_operand.vmem [shape: f32[1,96], index: 2, kind: input, shape index: {}]
  %s3 = inlined_call_operand.vmem [shape: bf16[32,128], index: 3, kind: input, shape index: {}]
  %s4 = inlined_call_operand.vmem [shape: f32[1,128], index: 4, kind: input, shape index: {}]
  %s5 = inlined_call_operand.vmem [shape: f32[16,128], index: 5, kind: output, shape index: {}]
  %s6 = sld [smem:[#allocation0]]
  $region30: #{multihead_attention.1} parent=0
    _
  %s8 = ssub.s32 1, %s6
  %s9 = scalar_select 0, %s8, %s6
  // Predicated region
  $region2: #{multihead_attention.1} parent=0 // pred_check
    _
  $region3: #{multihead_attention.1} parent=0 // pred_check_branch
    %11 = sbr.rel (0) target = $region5
  $region4: #{multihead_attention.1} parent=0 // pred_region
    _
  $region5: #{multihead_attention.1} parent=0 // pred_fallthru
    _
  // Predicated region
  $region6: #{multihead_attention.1} parent=0 // pred_check
    _
  $region7: #{multihead_attention.1} parent=0 // pred_check_branch
    %13 = sbr.rel (0) target = $region9
  $region8: #{multihead_attention.1} parent=0 // pred_region
    _
  $region9: #{multihead_attention.1} parent=0 // pred_fallthru
    _
  // Predicated region
  $region10: #{multihead_attention.1} parent=0 // pred_check
    _
  $region11: #{multihead_attention.1} parent=0 // pred_check_branch
    %15 = sbr.rel (0) target = $region13
  $region12: #{multihead_attention.1} parent=0 // pred_region
    _
  $region13: #{multihead_attention.1} parent=0 // pred_fallthru
    _
  // Predicated region
  $region14: #{multihead_attention.1} parent=0 // pred_check
    _
  $region15: #{multihead_attention.1} parent=0 // pred_check_branch
    %17 = sbr.rel (0) target = $region17
  $region16: #{multihead_attention.1} parent=0 // pred_region
    _
  $region17: #{multihead_attention.1} parent=0 // pred_fallthru
    _
  // Predicated region
  $region18: #{multihead_attention.1} parent=0 // pred_check
    _
  $region19: #{multihead_attention.1} parent=0 // pred_check_branch
    %19 = sbr.rel (0) target = $region21
  $region20: #{multihead_attention.1} parent=0 // pred_region
    _
  $region21: #{multihead_attention.1} parent=0 // pred_fallthru
    _
  %v21 = vld [vmem:[%s0] sm:$0xf]
  %v22 = vld [vmem:[%s0 + $0x4] sm:$0xf]
  %v23 = vld [vmem:[%s1] sm:$0xf]
  %v24 = vld [vmem:[%s1 + $0x4] sm:$0xf]
  %v25 = vld [vmem:[%s2] sm:$0x1]
  %v27 = vperm.slane %v25, 0
  %v31 = vunpack.c.l.b16 %v21
  %v32 = vunpack.c.l.b16 %v22
  %v33 = vpack.c.b16 %v32, %v31
  %v36 = vunpack.c.l.b16 %v23
  %v37 = vunpack.c.l.b16 %v24
  %v38 = vpack.c.b16 %v37, %v36
  %vm40 = vcmask 130048
  %v42 = vsel %vm40, %v33, 0
  %44 = vmatpush.bf16.msra.mxu0 0
  %45 = vmatpush.bf16.msra.mxu0 0
  %46 = vmatpush.bf16.msra.mxu0 0
  %47 = vmatpush.bf16.msra.mxu0 0
  %48 = vmatpush.bf16.msra.mxu0 0
  %49 = vmatpush.bf16.msra.mxu0 0
  %50 = vmatpush.bf16.msra.mxu0 0
  %51 = vmatpush.bf16.msra.mxu0 %v38
  %52 = vmatmul.bf16.gmra.mxu0 %v42
  %v53 = vpop.f32.mrf.mxu0
  %v54 = vadd.f32 %v27, %v53
  %v55 = vpop.f32.mrf.mxu0
  %v56 = vadd.f32 %v27, %v55
  %57 = vdwg.mxu0
  %59 = vrot.lane.b32.xlu0 %v54, 120
  %v60 = vpop.permute.xlu0 %59
  %62 = vrot.lane.b32.xlu0 %v54, 112
  %v63 = vpop.permute.xlu0 %62
  %65 = vrot.lane.b32.xlu0 %v54, 104
  %v66 = vpop.permute.xlu0 %65
  %69 = vrot.lane.b32.xlu0 %v56, 120
  %v70 = vpop.permute.xlu0 %69
  %72 = vrot.lane.b32.xlu0 %v56, 112
  %v73 = vpop.permute.xlu0 %72
  %75 = vrot.lane.b32.xlu0 %v56, 104
  %v76 = vpop.permute.xlu0 %75
  %v78 = vpack.c.bf16 %v54, %v54
  %v79 = vpack.c.bf16 %v60, %v60
  %v80 = vpack.c.bf16 %v63, %v63
  %v81 = vpack.c.bf16 %v66, %v66
  %v82 = vpack.c.bf16 %v56, %v56
  %v83 = vpack.c.bf16 %v70, %v70
  %v84 = vpack.c.bf16 %v73, %v73
  %v85 = vpack.c.bf16 %v76, %v76
  %v87 = vunpack.c.l.b16 %v78
  %v88 = vpack.c.b16 %v87, %v87
  %89 = vrot.lane.b32.xlu0 %v88, 96
  %v90 = vpop.permute.xlu0 %89
  %vm91 = vcmask 64512
  %v93 = vsel %vm91, %v78, 0
  %v96 = vsel %vm91, %v90, 0
  %98 = vmatpush.bf16.xpose.msra.mxu0 0
  %99 = vmatpush.bf16.xpose.msra.mxu0 0
  %100 = vmatpush.bf16.xpose.msra.mxu0 0
  %101 = vmatpush.bf16.xpose.msra.mxu0 0
  %102 = vmatpush.bf16.xpose.msra.mxu0 0
  %103 = vmatpush.bf16.xpose.msra.mxu0 0
  %104 = vmatpush.bf16.xpose.msra.mxu0 0
  %105 = vmatpush.bf16.xpose.msra.mxu0 %v96
  %106 = vmatmul.bf16.gmra.mxu0 %v93
  %v107 = vpop.f32.mrf.mxu0
  %v108 = vadd.f32 0.0, %v107
  %v109 = vpop.f32.mrf.mxu0
  %110 = vdwg.mxu0
  %v112 = vunpack.c.l.b16 %v79
  %v113 = vpack.c.b16 %v112, %v112
  %114 = vrot.lane.b32.xlu0 %v113, 96
  %v115 = vpop.permute.xlu0 %114
  %v117 = vsel %vm91, %v79, 0
  %v120 = vsel %vm91, %v115, 0
  %122 = vmatpush.bf16.xpose.msra.mxu0 0
  %123 = vmatpush.bf16.xpose.msra.mxu0 0
  %124 = vmatpush.bf16.xpose.msra.mxu0 0
  %125 = vmatpush.bf16.xpose.msra.mxu0 0
  %126 = vmatpush.bf16.xpose.msra.mxu0 0
  %127 = vmatpush.bf16.xpose.msra.mxu0 0
  %128 = vmatpush.bf16.xpose.msra.mxu0 0
  %129 = vmatpush.bf16.xpose.msra.mxu0 %v120
  %130 = vmatmul.bf16.gmra.mxu0 %v117
  %v131 = vpop.f32.mrf.mxu0
  %v132 = vadd.f32 0.0, %v131
  %v133 = vpop.f32.mrf.mxu0
  %134 = vdwg.mxu0
  %v136 = vunpack.c.l.b16 %v80
  %v137 = vpack.c.b16 %v136, %v136
  %138 = vrot.lane.b32.xlu0 %v137, 96
  %v139 = vpop.permute.xlu0 %138
  %v141 = vsel %vm91, %v80, 0
  %v144 = vsel %vm91, %v139, 0
  %146 = vmatpush.bf16.xpose.msra.mxu0 0
  %147 = vmatpush.bf16.xpose.msra.mxu0 0
  %148 = vmatpush.bf16.xpose.msra.mxu0 0
  %149 = vmatpush.bf16.xpose.msra.mxu0 0
  %150 = vmatpush.bf16.xpose.msra.mxu0 0
  %151 = vmatpush.bf16.xpose.msra.mxu0 0
  %152 = vmatpush.bf16.xpose.msra.mxu0 0
  %153 = vmatpush.bf16.xpose.msra.mxu0 %v144
  %154 = vmatmul.bf16.gmra.mxu0 %v141
  %v155 = vpop.f32.mrf.mxu0
  %v156 = vadd.f32 0.0, %v155
  %v157 = vpop.f32.mrf.mxu0
  %158 = vdwg.mxu0
  %v160 = vunpack.c.l.b16 %v81
  %v161 = vpack.c.b16 %v160, %v160
  %162 = vrot.lane.b32.xlu0 %v161, 96
  %v163 = vpop.permute.xlu0 %162
  %v165 = vsel %vm91, %v81, 0
  %v168 = vsel %vm91, %v163, 0
  %170 = vmatpush.bf16.xpose.msra.mxu0 0
  %171 = vmatpush.bf16.xpose.msra.mxu0 0
  %172 = vmatpush.bf16.xpose.msra.mxu0 0
  %173 = vmatpush.bf16.xpose.msra.mxu0 0
  %174 = vmatpush.bf16.xpose.msra.mxu0 0
  %175 = vmatpush.bf16.xpose.msra.mxu0 0
  %176 = vmatpush.bf16.xpose.msra.mxu0 0
  %177 = vmatpush.bf16.xpose.msra.mxu0 %v168
  %178 = vmatmul.bf16.gmra.mxu0 %v165
  %v179 = vpop.f32.mrf.mxu0
  %v180 = vadd.f32 0.0, %v179
  %v181 = vpop.f32.mrf.mxu0
  %182 = vdwg.mxu0
  %v184 = vunpack.c.l.b16 %v82
  %v185 = vpack.c.b16 %v184, %v184
  %186 = vrot.lane.b32.xlu0 %v185, 96
  %v187 = vpop.permute.xlu0 %186
  %v189 = vsel %vm91, %v82, 0
  %v192 = vsel %vm91, %v187, 0
  %194 = vmatpush.bf16.xpose.msra.mxu0 0
  %195 = vmatpush.bf16.xpose.msra.mxu0 0
  %196 = vmatpush.bf16.xpose.msra.mxu0 0
  %197 = vmatpush.bf16.xpose.msra.mxu0 0
  %198 = vmatpush.bf16.xpose.msra.mxu0 0
  %199 = vmatpush.bf16.xpose.msra.mxu0 0
  %200 = vmatpush.bf16.xpose.msra.mxu0 0
  %201 = vmatpush.bf16.xpose.msra.mxu0 %v192
  %202 = vmatmul.bf16.gmra.mxu0 %v189
  %v203 = vpop.f32.mrf.mxu0
  %v204 = vadd.f32 0.0, %v203
  %v205 = vpop.f32.mrf.mxu0
  %206 = vdwg.mxu0
  %v208 = vunpack.c.l.b16 %v83
  %v209 = vpack.c.b16 %v208, %v208
  %210 = vrot.lane.b32.xlu0 %v209, 96
  %v211 = vpop.permute.xlu0 %210
  %v213 = vsel %vm91, %v83, 0
  %v216 = vsel %vm91, %v211, 0
  %218 = vmatpush.bf16.xpose.msra.mxu0 0
  %219 = vmatpush.bf16.xpose.msra.mxu0 0
  %220 = vmatpush.bf16.xpose.msra.mxu0 0
  %221 = vmatpush.bf16.xpose.msra.mxu0 0
  %222 = vmatpush.bf16.xpose.msra.mxu0 0
  %223 = vmatpush.bf16.xpose.msra.mxu0 0
  %224 = vmatpush.bf16.xpose.msra.mxu0 0
  %225 = vmatpush.bf16.xpose.msra.mxu0 %v216
  %226 = vmatmul.bf16.gmra.mxu0 %v213
  %v227 = vpop.f32.mrf.mxu0
  %v228 = vadd.f32 0.0, %v227
  %v229 = vpop.f32.mrf.mxu0
  %230 = vdwg.mxu0
  %v232 = vunpack.c.l.b16 %v84
  %v233 = vpack.c.b16 %v232, %v232
  %234 = vrot.lane.b32.xlu0 %v233, 96
  %v235 = vpop.permute.xlu0 %234
  %v237 = vsel %vm91, %v84, 0
  %v240 = vsel %vm91, %v235, 0
  %242 = vmatpush.bf16.xpose.msra.mxu0 0
  %243 = vmatpush.bf16.xpose.msra.mxu0 0
  %244 = vmatpush.bf16.xpose.msra.mxu0 0
  %245 = vmatpush.bf16.xpose.msra.mxu0 0
  %246 = vmatpush.bf16.xpose.msra.mxu0 0
  %247 = vmatpush.bf16.xpose.msra.mxu0 0
  %248 = vmatpush.bf16.xpose.msra.mxu0 0
  %249 = vmatpush.bf16.xpose.msra.mxu0 %v240
  %250 = vmatmul.bf16.gmra.mxu0 %v237
  %v251 = vpop.f32.mrf.mxu0
  %v252 = vadd.f32 0.0, %v251
  %v253 = vpop.f32.mrf.mxu0
  %254 = vdwg.mxu0
  %v256 = vunpack.c.l.b16 %v85
  %v257 = vpack.c.b16 %v256, %v256
  %258 = vrot.lane.b32.xlu0 %v257, 96
  %v259 = vpop.permute.xlu0 %258
  %v261 = vsel %vm91, %v85, 0
  %v264 = vsel %vm91, %v259, 0
  %266 = vmatpush.bf16.xpose.msra.mxu0 0
  %267 = vmatpush.bf16.xpose.msra.mxu0 0
  %268 = vmatpush.bf16.xpose.msra.mxu0 0
  %269 = vmatpush.bf16.xpose.msra.mxu0 0
  %270 = vmatpush.bf16.xpose.msra.mxu0 0
  %271 = vmatpush.bf16.xpose.msra.mxu0 0
  %272 = vmatpush.bf16.xpose.msra.mxu0 0
  %273 = vmatpush.bf16.xpose.msra.mxu0 %v264
  %274 = vmatmul.bf16.gmra.mxu0 %v261
  %v275 = vpop.f32.mrf.mxu0
  %v276 = vadd.f32 0.0, %v275
  %v277 = vpop.f32.mrf.mxu0
  %278 = vdwg.mxu0
  %v279 = vsel %vm91, %v108, -inf
  %280 = vmax.xlane.f32.xlu0 %v279
  %v281 = vpop.xlane.xlu0 %280
  %v282 = vsel %vm91, %v132, -inf
  %283 = vmax.xlane.f32.xlu0 %v282
  %v284 = vpop.xlane.xlu0 %283
  %v285 = vsel %vm91, %v156, -inf
  %286 = vmax.xlane.f32.xlu0 %v285
  %v287 = vpop.xlane.xlu0 %286
  %v288 = vsel %vm91, %v180, -inf
  %289 = vmax.xlane.f32.xlu0 %v288
  %v290 = vpop.xlane.xlu0 %289
  %v291 = vsel %vm91, %v204, -inf
  %292 = vmax.xlane.f32.xlu0 %v291
  %v293 = vpop.xlane.xlu0 %292
  %v294 = vsel %vm91, %v228, -inf
  %295 = vmax.xlane.f32.xlu0 %v294
  %v296 = vpop.xlane.xlu0 %295
  %v297 = vsel %vm91, %v252, -inf
  %298 = vmax.xlane.f32.xlu0 %v297
  %v299 = vpop.xlane.xlu0 %298
  %v300 = vsel %vm91, %v276, -inf
  %301 = vmax.xlane.f32.xlu0 %v300
  %v302 = vpop.xlane.xlu0 %301
  %v303 = vsub.f32 %v108, %v281
  %v304 = vsub.f32 %v132, %v284
  %v305 = vsub.f32 %v156, %v287
  %v306 = vsub.f32 %v180, %v290
  %v307 = vsub.f32 %v204, %v293
  %v308 = vsub.f32 %v228, %v296
  %v309 = vsub.f32 %v252, %v299
  %v310 = vsub.f32 %v276, %v302
  %v311 = vmul.f32 %v303, 1.442695
  %v312 = vpow.pop %v311
  %v313 = vmul.f32 %v304, 1.442695
  %v314 = vpow.pop %v313
  %v315 = vmul.f32 %v305, 1.442695
  %v316 = vpow.pop %v315
  %v317 = vmul.f32 %v306, 1.442695
  %v318 = vpow.pop %v317
  %v319 = vmul.f32 %v307, 1.442695
  %v320 = vpow.pop %v319
  %v321 = vmul.f32 %v308, 1.442695
  %v322 = vpow.pop %v321
  %v323 = vmul.f32 %v309, 1.442695
  %v324 = vpow.pop %v323
  %v325 = vmul.f32 %v310, 1.442695
  %v326 = vpow.pop %v325
  %v327 = vsel %vm91, %v312, 0.0
  %328 = vadd.xlane.f32.xlu0 %v327
  %v329 = vpop.xlane.xlu0 %328
  %v330 = vsel %vm91, %v314, 0.0
  %331 = vadd.xlane.f32.xlu0 %v330
  %v332 = vpop.xlane.xlu0 %331
  %v333 = vsel %vm91, %v316, 0.0
  %334 = vadd.xlane.f32.xlu0 %v333
  %v335 = vpop.xlane.xlu0 %334
  %v336 = vsel %vm91, %v318, 0.0
  %337 = vadd.xlane.f32.xlu0 %v336
  %v338 = vpop.xlane.xlu0 %337
  %v339 = vsel %vm91, %v320, 0.0
  %340 = vadd.xlane.f32.xlu0 %v339
  %v341 = vpop.xlane.xlu0 %340
  %v342 = vsel %vm91, %v322, 0.0
  %343 = vadd.xlane.f32.xlu0 %v342
  %v344 = vpop.xlane.xlu0 %343
  %v345 = vsel %vm91, %v324, 0.0
  %346 = vadd.xlane.f32.xlu0 %v345
  %v347 = vpop.xlane.xlu0 %346
  %v348 = vsel %vm91, %v326, 0.0
  %349 = vadd.xlane.f32.xlu0 %v348
  %v350 = vpop.xlane.xlu0 %349
  %v351 = vrcp.pop %v329
  %v352 = vrcp.pop %v332
  %v353 = vrcp.pop %v335
  %v354 = vrcp.pop %v338
  %v355 = vrcp.pop %v341
  %v356 = vrcp.pop %v344
  %v357 = vrcp.pop %v347
  %v358 = vrcp.pop %v350
  %v359 = vmul.f32 %v312, %v351
  %v360 = vmul.f32 %v314, %v352
  %v361 = vmul.f32 %v316, %v353
  %v362 = vmul.f32 %v318, %v354
  %v363 = vmul.f32 %v320, %v355
  %v364 = vmul.f32 %v322, %v356
  %v365 = vmul.f32 %v324, %v357
  %v366 = vmul.f32 %v326, %v358
  %v367 = vpack.c.bf16 %v359, %v359
  %v368 = vpack.c.bf16 %v360, %v360
  %v369 = vpack.c.bf16 %v361, %v361
  %v370 = vpack.c.bf16 %v362, %v362
  %v371 = vpack.c.bf16 %v363, %v363
  %v372 = vpack.c.bf16 %v364, %v364
  %v373 = vpack.c.bf16 %v365, %v365
  %v374 = vpack.c.bf16 %v366, %v366
  %375 = vrot.lane.b32.xlu0 %v88, 64
  %v376 = vpop.permute.xlu0 %375
  %v378 = vsel %vm91, %v367, 0
  %vm380 = vcmask 1043456
  %v382 = vsel %vm380, %v376, 0
  %384 = vmatpush.bf16.msra.mxu0 0
  %385 = vmatpush.bf16.msra.mxu0 0
  %386 = vmatpush.bf16.msra.mxu0 0
  %387 = vmatpush.bf16.msra.mxu0 0
  %388 = vmatpush.bf16.msra.mxu0 0
  %389 = vmatpush.bf16.msra.mxu0 0
  %390 = vmatpush.bf16.msra.mxu0 0
  %391 = vmatpush.bf16.msra.mxu0 %v382
  %392 = vmatmul.bf16.gmra.mxu0 %v378
  %v393 = vpop.f32.mrf.mxu0
  %v394 = vadd.f32 0.0, %v393
  %v395 = vpop.f32.mrf.mxu0
  %396 = vdwg.mxu0
  %397 = vrot.lane.b32.xlu0 %v113, 64
  %v398 = vpop.permute.xlu0 %397
  %v400 = vsel %vm91, %v368, 0
  %v403 = vsel %vm380, %v398, 0
  %405 = vmatpush.bf16.msra.mxu0 0
  %406 = vmatpush.bf16.msra.mxu0 0
  %407 = vmatpush.bf16.msra.mxu0 0
  %408 = vmatpush.bf16.msra.mxu0 0
  %409 = vmatpush.bf16.msra.mxu0 0
  %410 = vmatpush.bf16.msra.mxu0 0
  %411 = vmatpush.bf16.msra.mxu0 0
  %412 = vmatpush.bf16.msra.mxu0 %v403
  %413 = vmatmul.bf16.gmra.mxu0 %v400
  %v414 = vpop.f32.mrf.mxu0
  %v415 = vadd.f32 0.0, %v414
  %v416 = vpop.f32.mrf.mxu0
  %417 = vdwg.mxu0
  %418 = vrot.lane.b32.xlu0 %v137, 64
  %v419 = vpop.permute.xlu0 %418
  %v421 = vsel %vm91, %v369, 0
  %v424 = vsel %vm380, %v419, 0
  %426 = vmatpush.bf16.msra.mxu0 0
  %427 = vmatpush.bf16.msra.mxu0 0
  %428 = vmatpush.bf16.msra.mxu0 0
  %429 = vmatpush.bf16.msra.mxu0 0
  %430 = vmatpush.bf16.msra.mxu0 0
  %431 = vmatpush.bf16.msra.mxu0 0
  %432 = vmatpush.bf16.msra.mxu0 0
  %433 = vmatpush.bf16.msra.mxu0 %v424
  %434 = vmatmul.bf16.gmra.mxu0 %v421
  %v435 = vpop.f32.mrf.mxu0
  %v436 = vadd.f32 0.0, %v435
  %v437 = vpop.f32.mrf.mxu0
  %438 = vdwg.mxu0
  %439 = vrot.lane.b32.xlu0 %v161, 64
  %v440 = vpop.permute.xlu0 %439
  %v442 = vsel %vm91, %v370, 0
  %v445 = vsel %vm380, %v440, 0
  %447 = vmatpush.bf16.msra.mxu0 0
  %448 = vmatpush.bf16.msra.mxu0 0
  %449 = vmatpush.bf16.msra.mxu0 0
  %450 = vmatpush.bf16.msra.mxu0 0
  %451 = vmatpush.bf16.msra.mxu0 0
  %452 = vmatpush.bf16.msra.mxu0 0
  %453 = vmatpush.bf16.msra.mxu0 0
  %454 = vmatpush.bf16.msra.mxu0 %v445
  %455 = vmatmul.bf16.gmra.mxu0 %v442
  %v456 = vpop.f32.mrf.mxu0
  %v457 = vadd.f32 0.0, %v456
  %v458 = vpop.f32.mrf.mxu0
  %459 = vdwg.mxu0
  %460 = vrot.lane.b32.xlu0 %v185, 64
  %v461 = vpop.permute.xlu0 %460
  %v463 = vsel %vm91, %v371, 0
  %v466 = vsel %vm380, %v461, 0
  %468 = vmatpush.bf16.msra.mxu0 0
  %469 = vmatpush.bf16.msra.mxu0 0
  %470 = vmatpush.bf16.msra.mxu0 0
  %471 = vmatpush.bf16.msra.mxu0 0
  %472 = vmatpush.bf16.msra.mxu0 0
  %473 = vmatpush.bf16.msra.mxu0 0
  %474 = vmatpush.bf16.msra.mxu0 0
  %475 = vmatpush.bf16.msra.mxu0 %v466
  %476 = vmatmul.bf16.gmra.mxu0 %v463
  %v477 = vpop.f32.mrf.mxu0
  %v478 = vadd.f32 0.0, %v477
  %v479 = vpop.f32.mrf.mxu0
  %480 = vdwg.mxu0
  %481 = vrot.lane.b32.xlu0 %v209, 64
  %v482 = vpop.permute.xlu0 %481
  %v484 = vsel %vm91, %v372, 0
  %v487 = vsel %vm380, %v482, 0
  %489 = vmatpush.bf16.msra.mxu0 0
  %490 = vmatpush.bf16.msra.mxu0 0
  %491 = vmatpush.bf16.msra.mxu0 0
  %492 = vmatpush.bf16.msra.mxu0 0
  %493 = vmatpush.bf16.msra.mxu0 0
  %494 = vmatpush.bf16.msra.mxu0 0
  %495 = vmatpush.bf16.msra.mxu0 0
  %496 = vmatpush.bf16.msra.mxu0 %v487
  %497 = vmatmul.bf16.gmra.mxu0 %v484
  %v498 = vpop.f32.mrf.mxu0
  %v499 = vadd.f32 0.0, %v498
  %v500 = vpop.f32.mrf.mxu0
  %501 = vdwg.mxu0
  %502 = vrot.lane.b32.xlu0 %v233, 64
  %v503 = vpop.permute.xlu0 %502
  %v505 = vsel %vm91, %v373, 0
  %v508 = vsel %vm380, %v503, 0
  %510 = vmatpush.bf16.msra.mxu0 0
  %511 = vmatpush.bf16.msra.mxu0 0
  %512 = vmatpush.bf16.msra.mxu0 0
  %513 = vmatpush.bf16.msra.mxu0 0
  %514 = vmatpush.bf16.msra.mxu0 0
  %515 = vmatpush.bf16.msra.mxu0 0
  %516 = vmatpush.bf16.msra.mxu0 0
  %517 = vmatpush.bf16.msra.mxu0 %v508
  %518 = vmatmul.bf16.gmra.mxu0 %v505
  %v519 = vpop.f32.mrf.mxu0
  %v520 = vadd.f32 0.0, %v519
  %v521 = vpop.f32.mrf.mxu0
  %522 = vdwg.mxu0
  %523 = vrot.lane.b32.xlu0 %v257, 64
  %v524 = vpop.permute.xlu0 %523
  %v526 = vsel %vm91, %v374, 0
  %v529 = vsel %vm380, %v524, 0
  %531 = vmatpush.bf16.msra.mxu0 0
  %532 = vmatpush.bf16.msra.mxu0 0
  %533 = vmatpush.bf16.msra.mxu0 0
  %534 = vmatpush.bf16.msra.mxu0 0
  %535 = vmatpush.bf16.msra.mxu0 0
  %536 = vmatpush.bf16.msra.mxu0 0
  %537 = vmatpush.bf16.msra.mxu0 0
  %538 = vmatpush.bf16.msra.mxu0 %v529
  %539 = vmatmul.bf16.gmra.mxu0 %v526
  %v540 = vpop.f32.mrf.mxu0
  %v541 = vadd.f32 0.0, %v540
  %v542 = vpop.f32.mrf.mxu0
  %543 = vdwg.mxu0
  %545 = vrot.lane.b32.xlu0 %v415, 8
  %v546 = vpop.permute.xlu0 %545
  %549 = vrot.lane.b32.xlu0 %v436, 16
  %v550 = vpop.permute.xlu0 %549
  %553 = vrot.lane.b32.xlu0 %v457, 24
  %v554 = vpop.permute.xlu0 %553
  %v556 = vsel %vm91, %v394, %v546
  %v557 = vsel %vm40, %v556, %v550
  %vm558 = vcmask 195584
  %v559 = vsel %vm558, %v557, %v554
  %561 = vrot.lane.b32.xlu0 %v499, 8
  %v562 = vpop.permute.xlu0 %561
  %565 = vrot.lane.b32.xlu0 %v520, 16
  %v566 = vpop.permute.xlu0 %565
  %569 = vrot.lane.b32.xlu0 %v541, 24
  %v570 = vpop.permute.xlu0 %569
  %v572 = vsel %vm91, %v478, %v562
  %v573 = vsel %vm40, %v572, %v566
  %v574 = vsel %vm558, %v573, %v570
  %v575 = vpack.c.bf16 %v574, %v559
  %v576 = vld [vmem:[%s3] sm:$0xf]
  %v577 = vld [vmem:[%s3 + $0x4] sm:$0xf]
  %v578 = vld [vmem:[%s3 + $0x8] sm:$0xf]
  %v579 = vld [vmem:[%s3 + $0xc] sm:$0xf]
  %v580 = vld [vmem:[%s4] sm:$0x1]
  %v582 = vperm.slane %v580, 0
  %v588 = vunpack.c.l.b16 %v576
  %v589 = vunpack.c.l.b16 %v577
  %v590 = vunpack.c.l.b16 %v578
  %v591 = vunpack.c.l.b16 %v579
  %v592 = vpack.c.b16 %v589, %v588
  %v593 = vpack.c.b16 %v591, %v590
  %vm596 = vcmask 261120
  %v598 = vsel %vm596, %v575, 0
  %600 = vmatpush.bf16.msra.mxu0 0
  %601 = vmatpush.bf16.msra.mxu0 0
  %602 = vmatpush.bf16.msra.mxu0 0
  %603 = vmatpush.bf16.msra.mxu0 0
  %604 = vmatpush.bf16.msra.mxu0 0
  %605 = vmatpush.bf16.msra.mxu0 0
  %606 = vmatpush.bf16.msra.mxu0 %v593
  %607 = vmatpush.bf16.msra.mxu0 %v592
  %608 = vmatmul.bf16.gmra.mxu0 %v598
  %v609 = vpop.f32.mrf.mxu0
  %v610 = vadd.f32 %v582, %v609
  %v611 = vpop.f32.mrf.mxu0
  %v612 = vadd.f32 %v582, %v611
  %613 = vdwg.mxu0
  %614 = vst [vmem:[%s5] sm:$0xff] %v610
  %615 = vst [vmem:[%s5 + $0x8] sm:$0xff] %v612
  // Predicated region
  $region22: #{multihead_attention.1} parent=0 // pred_check
    _
  $region23: #{multihead_attention.1} parent=0 // pred_check_branch
    %617 = sbr.rel (0) target = $region25
  $region24: #{multihead_attention.1} parent=0 // pred_region
    _
  $region25: #{multihead_attention.1} parent=0 // pred_fallthru
    _
  // Predicated region
  $region26: #{multihead_attention.1} parent=0 // pred_check
    _
  $region27: #{multihead_attention.1} parent=0 // pred_check_branch
    %619 = sbr.rel (0) target = $region29
  $region28: #{multihead_attention.1} parent=0 // pred_region
    _
  $region29: #{multihead_attention.1} parent=0 // pred_fallthru
    _

</llo_original>
